<compile_context>
chip_gen: v7x
topology: tpu7x:2x2x1
jax: 0.10.0
libtpu: 0.0.40
codegen_flags: <defaults>
</compile_context>

<pallas_src>
import math

import jax
import jax.numpy as jnp
from jax import lax
from jax.experimental import pallas as pl
from jax.experimental.pallas import tpu as pltpu


def _sinusoidal_table(total_time_steps: int, time_emb_dims: int) -> jnp.ndarray:
    """Reference-only table (matches nn.Embedding.from_pretrained in the PyTorch spec)."""
    half_dim = time_emb_dims // 2
    scale = math.log(10000.0) / (half_dim - 1)
    freqs = jnp.exp(jnp.arange(half_dim, dtype=jnp.float32) * -scale)     # (half,)
    ts = jnp.arange(total_time_steps, dtype=jnp.float32)                  # (T,)
    ang = ts[:, None] * freqs[None, :]                                    # (T, half)
    return jnp.concatenate([jnp.sin(ang), jnp.cos(ang)], axis=-1)         # (T, D)


def _time_emb_kernel(t_ref,            # VMEM: (B, 1) float32 timestep values
                     w1_ref, b1_ref,   # VMEM: (D, E) bf16, (1, E) f32
                     w2_ref, b2_ref,   # VMEM: (E, E) bf16, (1, E) f32
                     out_ref):         # VMEM: (B, E) f32
    D = w1_ref.shape[0]
    half = D // 2
    scale = math.log(10000.0) / (half - 1)

    # Sinusoidal embedding computed in-register from a (1, D) iota:
    #   x[:, c] = sin(t * f_c)        for c <  half
    #   x[:, c] = cos(t * f_{c-half}) for c >= half
    col = lax.broadcasted_iota(jnp.int32, (1, D), 1)                     # (1, D)
    idx = jnp.where(col < half, col, col - half).astype(jnp.float32)
    freqs = jnp.exp(idx * jnp.float32(-scale))                           # (1, D)
    ang = t_ref[...] * freqs                                             # (B,1)*(1,D)->(B,D)
    x = jnp.where(col < half, jnp.sin(ang), jnp.cos(ang))                # (B, D) f32

    # Linear(D -> E) + SiLU (bf16 operands, f32 accumulate on the MXU).
    h = jnp.dot(x.astype(jnp.bfloat16), w1_ref[...],
                preferred_element_type=jnp.float32) + b1_ref[...]
    h = h * jax.nn.sigmoid(h)

    # Linear(E -> E).
    out = jnp.dot(h.astype(jnp.bfloat16), w2_ref[...],
                  preferred_element_type=jnp.float32) + b2_ref[...]
    out_ref[...] = out.astype(out_ref.dtype)


def prepare_time_mlp_params(w1, b1, w2, b2):
    """One-time (init-time) parameter prep: bf16 weights, (1, E) f32 biases.

    Call this ONCE when the model is built; pass the results to every step so the
    per-call jitted path contains no dtype-convert ops.
    """
    D, E = w1.shape
    return (w1.astype(jnp.bfloat16),
            b1.reshape(1, E).astype(jnp.float32),
            w2.astype(jnp.bfloat16),
            b2.reshape(1, E).astype(jnp.float32))


@jax.jit
def sinusoidal_position_embeddings(time, w1_bf16, b1_2d, w2_bf16, b2_2d):
    """time: (B,) int32 -> (B, E) float32. Weights must already be prepared (bf16)."""
    B = time.shape[0]
    D, E = w1_bf16.shape

    # Only per-call data-dependent prep: 32 bytes of timesteps.
    t_f32 = time.astype(jnp.float32).reshape(B, 1)

    grid_spec = pltpu.PrefetchScalarGridSpec(
        num_scalar_prefetch=0,
        grid=(1,),
        in_specs=[
            pl.BlockSpec((B, 1), lambda i: (0, 0)),    # timesteps (tiny)
            pl.BlockSpec((D, E), lambda i: (0, 0)),    # W1 (bf16)
            pl.BlockSpec((1, E), lambda i: (0, 0)),    # b1
            pl.BlockSpec((E, E), lambda i: (0, 0)),    # W2 (bf16)
            pl.BlockSpec((1, E), lambda i: (0, 0)),    # b2
        ],
        out_specs=pl.BlockSpec((B, E), lambda i: (0, 0)),
    )

    # Advisory cost hint so XLA can overlap this sub-microsecond call with neighbors.
    flops = 2 * (B * D * E + B * E * E)
    transcendentals = D + 2 * B * D + B * E           # exp(freqs) + sin/cos + sigmoid
    bytes_accessed = (w1_bf16.size * 2 + w2_bf16.size * 2 +
                      b1_2d.size * 4 + b2_2d.size * 4 + B * 4 + B * E * 4)

    return pl.pallas_call(
        _time_emb_kernel,
        out_shape=jax.ShapeDtypeStruct((B, E), jnp.float32),
        grid_spec=grid_spec,
        compiler_params=pltpu.CompilerParams(
            dimension_semantics=("arbitrary",)),
        cost_estimate=pl.CostEstimate(flops=flops,
                                      transcendentals=transcendentals,
                                      bytes_accessed=bytes_accessed),
    )(t_f32, w1_bf16, b1_2d, w2_bf16, b2_2d)


def _reference(time, emb_table, w1, b1, w2, b2):
    """Mirrors the kernel's math (bf16 weights/operands, f32 accumulate)."""
    x = jnp.take(emb_table, time, axis=0)
    h = jnp.dot(x.astype(jnp.bfloat16), w1.astype(jnp.bfloat16),
                preferred_element_type=jnp.float32) + b1
    h = h * jax.nn.sigmoid(h)
    return jnp.dot(h.astype(jnp.bfloat16), w2.astype(jnp.bfloat16),
                   preferred_element_type=jnp.float32) + b2


if __name__ == "__main__":
    TOTAL_TIME_STEPS = 1000
    TIME_EMB_DIMS = 128
    TIME_EMB_DIMS_EXP = 512
    BATCH = 8

    key = jax.random.PRNGKey(0)
    k_t, k_w1, k_b1, k_w2, k_b2 = jax.random.split(key, 5)

    # Deterministic parameters (PyTorch nn.Linear-style uniform init bounds).
    bound1 = 1.0 / math.sqrt(TIME_EMB_DIMS)
    bound2 = 1.0 / math.sqrt(TIME_EMB_DIMS_EXP)
    w1 = jax.random.uniform(k_w1, (TIME_EMB_DIMS, TIME_EMB_DIMS_EXP),
                            jnp.float32, -bound1, bound1)
    b1 = jax.random.uniform(k_b1, (TIME_EMB_DIMS_EXP,), jnp.float32, -bound1, bound1)
    w2 = jax.random.uniform(k_w2, (TIME_EMB_DIMS_EXP, TIME_EMB_DIMS_EXP),
                            jnp.float32, -bound2, bound2)
    b2 = jax.random.uniform(k_b2, (TIME_EMB_DIMS_EXP,), jnp.float32, -bound2, bound2)

    # One-time parameter prep (init time, NOT per step).
    w1_b, b1_2d, w2_b, b2_2d = prepare_time_mlp_params(w1, b1, w2, b2)
    w1_b, b1_2d, w2_b, b2_2d = jax.block_until_ready((w1_b, b1_2d, w2_b, b2_2d))

    # Example timestep indices.
    time = jax.random.randint(k_t, (BATCH,), 0, TOTAL_TIME_STEPS, dtype=jnp.int32)

    out = sinusoidal_position_embeddings(time, w1_b, b1_2d, w2_b, b2_2d)
    out = jax.block_until_ready(out)

    emb_table = _sinusoidal_table(TOTAL_TIME_STEPS, TIME_EMB_DIMS)
    ref = _reference(time, emb_table, w1, b1, w2, b2)

    assert out.shape == (BATCH, TIME_EMB_DIMS_EXP)
    assert jnp.allclose(out, ref, atol=5e-3, rtol=5e-3), "mismatch vs reference"
    print("KERNEL_OK")
</pallas_src>

<mosaic_0001>
module attributes {stable_mosaic.version = 11 : i64} {
  func.func @_time_emb_kernel(%arg0: i32, %arg1: memref<8x1xf32, #tpu.memory_space<vmem>>, %arg2: memref<128x512xbf16, #tpu.memory_space<vmem>>, %arg3: memref<1x512xf32, #tpu.memory_space<vmem>>, %arg4: memref<512x512xbf16, #tpu.memory_space<vmem>>, %arg5: memref<1x512xf32, #tpu.memory_space<vmem>>, %arg6: memref<8x512xf32, #tpu.memory_space<vmem>>) attributes {dimension_semantics = [#tpu.dimension_semantics<arbitrary>], iteration_bounds = array<i64: 1>, scalar_prefetch = 0 : i64, scratch_operands = 0 : i64, tpu.core_type = #tpu.core_type<tc>, window_params = [{pipeline_mode = #tpu.pipeline_mode<synchronous>, transform_indices = @transform_0, window_bounds = array<i64: 8, 1>}, {pipeline_mode = #tpu.pipeline_mode<synchronous>, transform_indices = @transform_1, window_bounds = array<i64: 128, 512>}, {pipeline_mode = #tpu.pipeline_mode<synchronous>, transform_indices = @transform_2, window_bounds = array<i64: 1, 512>}, {pipeline_mode = #tpu.pipeline_mode<synchronous>, transform_indices = @transform_3, window_bounds = array<i64: 512, 512>}, {pipeline_mode = #tpu.pipeline_mode<synchronous>, transform_indices = @transform_4, window_bounds = array<i64: 1, 512>}, {pipeline_mode = #tpu.pipeline_mode<synchronous>, transform_indices = @transform_5, window_bounds = array<i64: 8, 512>}]} {
    %0 = tpu.iota {dimensions = array<i32: 1>} : vector<1x128xi32>
    %c64_i32 = arith.constant 64 : i32
    %1 = vector.broadcast %c64_i32 : i32 to vector<1x128xi32>
    %2 = arith.cmpi slt, %0, %1 : vector<1x128xi32>
    %c64_i32_0 = arith.constant 64 : i32
    %3 = vector.broadcast %c64_i32_0 : i32 to vector<1x128xi32>
    %4 = arith.subi %0, %3 : vector<1x128xi32>
    %5 = arith.select %2, %0, %4 : vector<1x128xi1>, vector<1x128xi32>
    %6 = arith.sitofp %5 : vector<1x128xi32> to vector<1x128xf32>
    %cst = arith.constant -0.146195874 : f32
    %7 = vector.broadcast %cst : f32 to vector<1x128xf32>
    %8 = arith.mulf %6, %7 : vector<1x128xf32>
    %9 = math.exp %8 : vector<1x128xf32>
    %c0 = arith.constant 0 : index
    %c0_1 = arith.constant 0 : index
    %10 = vector.load %arg1[%c0, %c0_1] : memref<8x1xf32, #tpu.memory_space<vmem>>, vector<8x1xf32>
    %11 = vector.broadcast %10 : vector<8x1xf32> to vector<8x128xf32>
    %12 = vector.broadcast %9 : vector<1x128xf32> to vector<8x128xf32>
    %13 = arith.mulf %11, %12 : vector<8x128xf32>
    %c64_i32_2 = arith.constant 64 : i32
    %14 = vector.broadcast %c64_i32_2 : i32 to vector<1x128xi32>
    %15 = arith.cmpi slt, %0, %14 : vector<1x128xi32>
    %16 = math.sin %13 : vector<8x128xf32>
    %17 = math.cos %13 : vector<8x128xf32>
    %18 = vector.shape_cast %15 : vector<1x128xi1> to vector<1x128xi1>
    %19 = vector.broadcast %18 : vector<1x128xi1> to vector<8x128xi1>
    %20 = arith.select %19, %16, %17 : vector<8x128xi1>, vector<8x128xf32>
    %21 = arith.truncf %20 : vector<8x128xf32> to vector<8x128xbf16>
    %c0_3 = arith.constant 0 : index
    %c0_4 = arith.constant 0 : index
    %22 = vector.load %arg2[%c0_3, %c0_4] : memref<128x512xbf16, #tpu.memory_space<vmem>>, vector<128x512xbf16>
    %cst_5 = arith.constant dense<0.000000e+00> : vector<8x512xf32>
    %23 = tpu.matmul %21, %22, %cst_5 {dimension_numbers = #tpu.dot_dimension_numbers<[1], [0], [0], [1], [0, 0, 1, 1], [], []>} : vector<8x128xbf16>, vector<128x512xbf16>, vector<8x512xf32> -> vector<8x512xf32>
    %c0_6 = arith.constant 0 : index
    %c0_7 = arith.constant 0 : index
    %24 = vector.load %arg3[%c0_6, %c0_7] : memref<1x512xf32, #tpu.memory_space<vmem>>, vector<1x512xf32>
    %25 = vector.broadcast %24 : vector<1x512xf32> to vector<8x512xf32>
    %26 = arith.addf %23, %25 : vector<8x512xf32>
    %27 = arith.negf %26 : vector<8x512xf32>
    %28 = math.exp %27 : vector<8x512xf32>
    %cst_8 = arith.constant 1.000000e+00 : f32
    %29 = vector.broadcast %cst_8 : f32 to vector<8x512xf32>
    %30 = arith.addf %29, %28 : vector<8x512xf32>
    %31 = arith.divf %29, %30 : vector<8x512xf32>
    %32 = arith.mulf %26, %31 : vector<8x512xf32>
    %33 = arith.truncf %32 : vector<8x512xf32> to vector<8x512xbf16>
    %c0_9 = arith.constant 0 : index
    %c0_10 = arith.constant 0 : index
    %34 = vector.load %arg4[%c0_9, %c0_10] : memref<512x512xbf16, #tpu.memory_space<vmem>>, vector<512x512xbf16>
    %cst_11 = arith.constant dense<0.000000e+00> : vector<8x512xf32>
    %35 = tpu.matmul %33, %34, %cst_11 {dimension_numbers = #tpu.dot_dimension_numbers<[1], [0], [0], [1], [0, 0, 1, 1], [], []>} : vector<8x512xbf16>, vector<512x512xbf16>, vector<8x512xf32> -> vector<8x512xf32>
    %c0_12 = arith.constant 0 : index
    %c0_13 = arith.constant 0 : index
    %36 = vector.load %arg5[%c0_12, %c0_13] : memref<1x512xf32, #tpu.memory_space<vmem>>, vector<1x512xf32>
    %37 = vector.broadcast %36 : vector<1x512xf32> to vector<8x512xf32>
    %38 = arith.addf %35, %37 : vector<8x512xf32>
    %c0_14 = arith.constant 0 : index
    %c0_15 = arith.constant 0 : index
    %39 = vector.load %arg6[%c0_14, %c0_15] : memref<8x512xf32, #tpu.memory_space<vmem>>, vector<8x512xf32>
    tpu.vector_store %arg6[%c0_14, %c0_15], %38 {strides = array<i32>} : memref<8x512xf32, #tpu.memory_space<vmem>>, vector<8x512xf32>,
    return
  }
  func.func @transform_0(%arg0: i32) -> (i32, i32) {
    %c0_i32 = arith.constant 0 : i32
    %c0_i32_0 = arith.constant 0 : i32
    %c0_i32_1 = arith.constant 0 : i32
    return %c0_i32, %c0_i32_0 : i32, i32
  }
  func.func @transform_1(%arg0: i32) -> (i32, i32) {
    %c0_i32 = arith.constant 0 : i32
    %c0_i32_0 = arith.constant 0 : i32
    %c0_i32_1 = arith.constant 0 : i32
    return %c0_i32, %c0_i32_0 : i32, i32
  }
  func.func @transform_2(%arg0: i32) -> (i32, i32) {
    %c0_i32 = arith.constant 0 : i32
    %c0_i32_0 = arith.constant 0 : i32
    %c0_i32_1 = arith.constant 0 : i32
    return %c0_i32, %c0_i32_0 : i32, i32
  }
  func.func @transform_3(%arg0: i32) -> (i32, i32) {
    %c0_i32 = arith.constant 0 : i32
    %c0_i32_0 = arith.constant 0 : i32
    %c0_i32_1 = arith.constant 0 : i32
    return %c0_i32, %c0_i32_0 : i32, i32
  }
  func.func @transform_4(%arg0: i32) -> (i32, i32) {
    %c0_i32 = arith.constant 0 : i32
    %c0_i32_0 = arith.constant 0 : i32
    %c0_i32_1 = arith.constant 0 : i32
    return %c0_i32, %c0_i32_0 : i32, i32
  }
  func.func @transform_5(%arg0: i32) -> (i32, i32) {
    %c0_i32 = arith.constant 0 : i32
    %c0_i32_0 = arith.constant 0 : i32
    %c0_i32_1 = arith.constant 0 : i32
    return %c0_i32, %c0_i32_0 : i32, i32
  }
}

</mosaic_0001>

<llo_original>
// kernel: sinusoidal_position_embeddings.1
$region0: #{sinusoidal_position_embeddings.1}
  #allocation0 [shape = 'u32[]', space=smem, size = 0x4, offset = 0x4, fixed_abs, tag = 'smem constant byte address 0x4 - core index']
  #allocation1 [shape = 'u32[144,128]{1,0:T(1,128)}', space=vmem, size = 0x12000, scoped, tag = 'internal scratch']
  %s0 = inlined_call_operand.vmem [shape: f32[8,1], index: 0, kind: input, shape index: {}]
  %s1 = inlined_call_operand.hbm [shape: bf16[128,512], index: 1, kind: input, shape index: {}]
  %s2 = inlined_call_operand.vmem [shape: f32[1,512], index: 2, kind: input, shape index: {}]
  %s3 = inlined_call_operand.hbm [shape: bf16[512,512], index: 3, kind: input, shape index: {}]
  %s4 = inlined_call_operand.vmem [shape: f32[1,512], index: 4, kind: input, shape index: {}]
  %s5 = inlined_call_operand.hbm [shape: f32[8,512], index: 5, kind: output, shape index: {}]
  %s6 = sld [smem:[#allocation0]]
  $region38: #{sinusoidal_position_embeddings.1} parent=0
    _
  %s8 = ssub.s32 1, %s6
  %s9 = scalar_select 0, %s8, %s6
  $region1: #{sinusoidal_position_embeddings.1} parent=0
    #allocation2 [shape = 'u8[131072]{0}', space=vmem, size = 0x20000, scoped, tag = 'input window, operand 1, single buffered']
    #allocation3 [shape = 's32[1]{0}', space=sflag, size = 0x4, scoped, tag = 'scoped memory for sinusoidal_position_embeddings.1']
    #allocation4 [shape = 's32[1]{0}', space=sflag, size = 0x4, scoped, tag = 'scoped memory for sinusoidal_position_embeddings.1']
    #allocation5 [shape = 'u8[524288]{0}', space=vmem, size = 0x80000, scoped, tag = 'input window, operand 3, single buffered']
    #allocation6 [shape = 's32[1]{0}', space=sflag, size = 0x4, scoped, tag = 'scoped memory for sinusoidal_position_embeddings.1']
    #allocation7 [shape = 'u8[16384]{0}', space=vmem, size = 0x4000, scoped, tag = 'output window, operand 0, single buffered']
    %10 = vsyncpa [#allocation3], 0
    %11 = vsyncpa [#allocation6], 0
    %12 = vsyncpa [#allocation4], 0
    // Predicated region
    $region2: #{sinusoidal_position_embeddings.1} parent=1 // pred_check
      _
    $region3: #{sinusoidal_position_embeddings.1} parent=1 // pred_check_branch
      %14 = sbr.rel (0) target = $region5
    $region4: #{sinusoidal_position_embeddings.1} parent=1 // pred_region
      _
    $region5: #{sinusoidal_position_embeddings.1} parent=1 // pred_fallthru
      _
    // Predicated region
    $region6: #{sinusoidal_position_embeddings.1} parent=1 // pred_check
      _
    $region7: #{sinusoidal_position_embeddings.1} parent=1 // pred_check_branch
      %16 = sbr.rel (0) target = $region9
    $region8: #{sinusoidal_position_embeddings.1} parent=1 // pred_region
      %s18 = ssub.s32 4096, 4096
      %19 = vsyncadd [#allocation3], %s18
      %s20 = sshll.u32 [#allocation2], 4
      %s21 = int_to_ptr.vmem [resolvable:$true] %s20
      %26 = dma.hbm_to_vmem [thread:$0]  %s1, 4096, %s21, [#allocation3], 256, 256, 16
    $region9: #{sinusoidal_position_embeddings.1} parent=1 // pred_fallthru
      _
    // Predicated region
    $region10: #{sinusoidal_position_embeddings.1} parent=1 // pred_check
      _
    $region11: #{sinusoidal_position_embeddings.1} parent=1 // pred_check_branch
      %28 = sbr.rel (0) target = $region13
    $region12: #{sinusoidal_position_embeddings.1} parent=1 // pred_region
      _
    $region13: #{sinusoidal_position_embeddings.1} parent=1 // pred_fallthru
      _
    // Predicated region
    $region14: #{sinusoidal_position_embeddings.1} parent=1 // pred_check
      _
    $region15: #{sinusoidal_position_embeddings.1} parent=1 // pred_check_branch
      %30 = sbr.rel (0) target = $region17
    $region16: #{sinusoidal_position_embeddings.1} parent=1 // pred_region
      %s32 = ssub.s32 16384, 16384
      %33 = vsyncadd [#allocation6], %s32
      %s34 = sshll.u32 [#allocation5], 4
      %s35 = int_to_ptr.vmem [resolvable:$true] %s34
      %40 = dma.hbm_to_vmem [thread:$0]  %s3, 16384, %s35, [#allocation6], 256, 256, 16
    $region17: #{sinusoidal_position_embeddings.1} parent=1 // pred_fallthru
      _
    // Predicated region
    $region18: #{sinusoidal_position_embeddings.1} parent=1 // pred_check
      _
    $region19: #{sinusoidal_position_embeddings.1} parent=1 // pred_check_branch
      %42 = sbr.rel (0) target = $region21
    $region20: #{sinusoidal_position_embeddings.1} parent=1 // pred_region
      _
    $region21: #{sinusoidal_position_embeddings.1} parent=1 // pred_fallthru
      _
    // Predicated region
    $region22: #{sinusoidal_position_embeddings.1} parent=1 // pred_check
      _
    $region23: #{sinusoidal_position_embeddings.1} parent=1 // pred_check_branch
      %44 = sbr.rel (0) target = $region25
    $region24: #{sinusoidal_position_embeddings.1} parent=1 // pred_region
      %45 = dma.done [#allocation3], 4096
    $region25: #{sinusoidal_position_embeddings.1} parent=1 // pred_fallthru
      _
    // Predicated region
    $region26: #{sinusoidal_position_embeddings.1} parent=1 // pred_check
      _
    $region27: #{sinusoidal_position_embeddings.1} parent=1 // pred_check_branch
      %47 = sbr.rel (0) target = $region29
    $region28: #{sinusoidal_position_embeddings.1} parent=1 // pred_region
      %48 = dma.done [#allocation6], 16384
    $region29: #{sinusoidal_position_embeddings.1} parent=1 // pred_fallthru
      _
    %v50 = vlaneseq
    %v51 = vand.u32 %v50, 127
    %vm52 = vcmp.lt.s32.totalorder %v51, 64
    %v53 = vsub.s32 %v51, 64
    %v54 = vsel %vm52, %v51, %v53
    %v55 = vcvt.s32.f32 %v54
    %v56 = vmul.f32 %v55, -0.14619587
    %v57 = vmul.f32 %v56, 1.442695
    %v58 = vpow.pop %v57
    %v59 = vld [vmem:[%s0] sm:$0xff]
    %61 = vset.pattern.permute.xlu0 0
    %62 = vperm.xlu0 %61, %v59
    %v63 = vpop.permute.xlu0 %62
    %v65 = vmul.f32 %v63, %v58
    %v66 = vand.u32 2147483647, %v65
    %vm67 = vcmp.le.f32.partialorder %v66, 0.7853982
    %vm68 = vcmp.lt.s32.totalorder %v65, 0
    %v69 = vand.u32 %v65, 2139095040
    %v70 = vshrl.u32 %v69, 23
    %v71 = vsub.s32 %v70, 127
    %v72 = vand.u32 2147483647, %v65
    %v73 = vand.u32 %v72, 8388607
    %v74 = vor.u32 %v73, 8388608
    %v75 = vsub.s32 0, %v74
    %v76 = vadd.s32 %v71, 1
    %vm77 = vcmp.gt.s32.totalorder %v76, 0
    %v78 = vsel %vm77, %v76, 0
    %v79 = vshrl.u32 %v78, 5
    %v80 = vand.u32 %v78, 31
    %v81 = vsub.s32 32, %v80
    %v82 = vshrl.u32 683565275, %v81
    %v83 = vshll.u32 683565275, %v80
    %v84 = vshrl.u32 2475754826, %v81
    %v85 = vor.u32 %v83, %v84
    %v86 = vshll.u32 2475754826, %v80
    %v87 = vshrl.u32 2131351028, %v81
    %v88 = vor.u32 %v86, %v87
    %v89 = vshll.u32 2131351028, %v80
    %v90 = vshrl.u32 2102212464, %v81
    %v91 = vor.u32 %v89, %v90
    %v92 = vshll.u32 2102212464, %v80
    %v93 = vshrl.u32 920167782, %v81
    %v94 = vor.u32 %v92, %v93
    %v95 = vshll.u32 920167782, %v80
    %v96 = vshrl.u32 1326507024, %v81
    %v97 = vor.u32 %v95, %v96
    %vm98 = vcmp.lt.s32.totalorder %v79, 1
    %vm99 = vcmp.lt.s32.totalorder %v79, 2
    %vm100 = vcmp.lt.s32.totalorder %v79, 3
    %vm101 = vcmp.lt.s32.totalorder %v79, 4
    %v102 = vsel %vm98, %v82, %v85
    %v103 = vsel %vm101, %v91, 2102212464
    %v104 = vsel %vm100, %v88, %v103
    %v105 = vsel %vm99, %v102, %v104
    %v106 = vsel %vm98, %v85, %v88
    %v107 = vsel %vm101, %v94, 920167782
    %v108 = vsel %vm100, %v91, %v107
    %v109 = vsel %vm99, %v106, %v108
    %v110 = vsel %vm98, %v88, %v91
    %v111 = vsel %vm101, %v97, 1326507024
    %v112 = vsel %vm100, %v94, %v111
    %v113 = vsel %vm99, %v110, %v112
    %v114 = vshll.u32 %v74, 8
    %v115 = vmul.u32.u64.compose %v114, %v113
    %v116 = vextract.low.u32 %v115
    %v117 = vextract.high.u32 %v115
    %v118 = vmul.u32.u64.compose %v114, %v109
    %v119 = vextract.low.u32 %v118
    %v120 = vextract.high.u32 %v118
    %v121 = vmul.u32 %v114, %v105
    %v122 = vadd.s32 %v117, %v119
    %vm123 = vc.u32 %v117, %v119
    %v124 = vadd.s32 %v120, 1
    %v125 = vsel %vm123, %v124, %v120
    %v126 = vadd.s32 %v121, %v125
    %v127 = vadd.s32 %v126, 536870912
    %v128 = vshrl.u32 %v127, 30
    %v129 = vshll.u32 %v128, 30
    %v130 = vsub.s32 %v126, %v129
    %vm131 = vcmp.lt.s32.totalorder %v130, 0
    %v132 = vsub.s32 0, %v130
    %v133 = vsel %vm131, %v132, %v130
    %v134 = vclz %v133
    %v135 = vsub.s32 %v134, 2
    %vm136 = vcmp.gt.s32.totalorder 0, %v135
    %v137 = vsel %vm136, 0, %v135
    %v138 = vsub.s32 32, %v137
    %v139 = vshll.u32 %v130, %v137
    %v140 = vshrl.u32 %v122, %v138
    %v141 = vor.u32 %v139, %v140
    %v142 = vsub.s32 4294967266, %v137
    %v143 = vadd.s32 %v142, 127
    %v144 = vshll.u32 %v143, 23
    %v145 = vor.u32 4788187, %v144
    %v146 = vand.u32 2147483647, %v145
    %v148 = vcvt.s32.f32 %v141
    %v149 = vmul.f32 %v148, %v146
    %v150 = vxor.u32 %v149, 2147483648
    %v151 = vsel %vm68, %v150, %v149
    %v152 = vsub.s32 4, %v128
    %v153 = vsel %vm68, %v152, %v128
    %v154 = vsel %vm67, %v65, %v151
    %v155 = vsel %vm67, 0, %v153
    %v156 = vcosq.f32.pop %v154
    %v157 = vsinq.f32.pop %v154
    %vm158 = vweird.f32 %v65
    %v159 = vadd.s32 %v155, 3
    %v160 = vand.u32 %v159, 3
    %vm161 = vcmp.lt.s32.totalorder %v160, 2
    %vm162 = vcmp.eq.s32.totalorder %v160, 0
    %v163 = vxor.u32 %v157, 2147483648
    %v164 = vsel %vm162, %v156, %v163
    %vm165 = vcmp.eq.s32.totalorder %v160, 2
    %v166 = vxor.u32 %v156, 2147483648
    %v167 = vsel %vm165, %v166, %v157
    %v168 = vsel %vm161, %v164, %v167
    %v169 = vsel %vm158, nan, %v168
    %v170 = vand.u32 2147483647, %v65
    %vm171 = vcmp.le.f32.partialorder %v170, 0.7853982
    %vm172 = vcmp.lt.s32.totalorder %v65, 0
    %v173 = vand.u32 %v65, 2139095040
    %v174 = vshrl.u32 %v173, 23
    %v175 = vsub.s32 %v174, 127
    %v176 = vand.u32 2147483647, %v65
    %v177 = vand.u32 %v176, 8388607
    %v178 = vor.u32 %v177, 8388608
    %v179 = vsub.s32 0, %v178
    %v180 = vadd.s32 %v175, 1
    %vm181 = vcmp.gt.s32.totalorder %v180, 0
    %v182 = vsel %vm181, %v180, 0
    %v183 = vshrl.u32 %v182, 5
    %v184 = vand.u32 %v182, 31
    %v185 = vsub.s32 32, %v184
    %v186 = vshrl.u32 683565275, %v185
    %v187 = vshll.u32 683565275, %v184
    %v188 = vshrl.u32 2475754826, %v185
    %v189 = vor.u32 %v187, %v188
    %v190 = vshll.u32 2475754826, %v184
    %v191 = vshrl.u32 2131351028, %v185
    %v192 = vor.u32 %v190, %v191
    %v193 = vshll.u32 2131351028, %v184
    %v194 = vshrl.u32 2102212464, %v185
    %v195 = vor.u32 %v193, %v194
    %v196 = vshll.u32 2102212464, %v184
    %v197 = vshrl.u32 920167782, %v185
    %v198 = vor.u32 %v196, %v197
    %v199 = vshll.u32 920167782, %v184
    %v200 = vshrl.u32 1326507024, %v185
    %v201 = vor.u32 %v199, %v200
    %vm202 = vcmp.lt.s32.totalorder %v183, 1
    %vm203 = vcmp.lt.s32.totalorder %v183, 2
    %vm204 = vcmp.lt.s32.totalorder %v183, 3
    %vm205 = vcmp.lt.s32.totalorder %v183, 4
    %v206 = vsel %vm202, %v186, %v189
    %v207 = vsel %vm205, %v195, 2102212464
    %v208 = vsel %vm204, %v192, %v207
    %v209 = vsel %vm203, %v206, %v208
    %v210 = vsel %vm202, %v189, %v192
    %v211 = vsel %vm205, %v198, 920167782
    %v212 = vsel %vm204, %v195, %v211
    %v213 = vsel %vm203, %v210, %v212
    %v214 = vsel %vm202, %v192, %v195
    %v215 = vsel %vm205, %v201, 1326507024
    %v216 = vsel %vm204, %v198, %v215
    %v217 = vsel %vm203, %v214, %v216
    %v218 = vshll.u32 %v178, 8
    %v219 = vmul.u32.u64.compose %v218, %v217
    %v220 = vextract.low.u32 %v219
    %v221 = vextract.high.u32 %v219
    %v222 = vmul.u32.u64.compose %v218, %v213
    %v223 = vextract.low.u32 %v222
    %v224 = vextract.high.u32 %v222
    %v225 = vmul.u32 %v218, %v209
    %v226 = vadd.s32 %v221, %v223
    %vm227 = vc.u32 %v221, %v223
    %v228 = vadd.s32 %v224, 1
    %v229 = vsel %vm227, %v228, %v224
    %v230 = vadd.s32 %v225, %v229
    %v231 = vadd.s32 %v230, 536870912
    %v232 = vshrl.u32 %v231, 30
    %v233 = vshll.u32 %v232, 30
    %v234 = vsub.s32 %v230, %v233
    %vm235 = vcmp.lt.s32.totalorder %v234, 0
    %v236 = vsub.s32 0, %v234
    %v237 = vsel %vm235, %v236, %v234
    %v238 = vclz %v237
    %v239 = vsub.s32 %v238, 2
    %vm240 = vcmp.gt.s32.totalorder 0, %v239
    %v241 = vsel %vm240, 0, %v239
    %v242 = vsub.s32 32, %v241
    %v243 = vshll.u32 %v234, %v241
    %v244 = vshrl.u32 %v226, %v242
    %v245 = vor.u32 %v243, %v244
    %v246 = vsub.s32 4294967266, %v241
    %v247 = vadd.s32 %v246, 127
    %v248 = vshll.u32 %v247, 23
    %v249 = vor.u32 4788187, %v248
    %v250 = vand.u32 2147483647, %v249
    %v252 = vcvt.s32.f32 %v245
    %v253 = vmul.f32 %v252, %v250
    %v254 = vxor.u32 %v253, 2147483648
    %v255 = vsel %vm172, %v254, %v253
    %v256 = vsub.s32 4, %v232
    %v257 = vsel %vm172, %v256, %v232
    %v258 = vsel %vm171, %v65, %v255
    %v259 = vsel %vm171, 0, %v257
    %v260 = vcosq.f32.pop %v258
    %v261 = vsinq.f32.pop %v258
    %vm262 = vweird.f32 %v65
    %v263 = vand.u32 %v259, 3
    %vm264 = vcmp.lt.s32.totalorder %v263, 2
    %vm265 = vcmp.eq.s32.totalorder %v263, 0
    %v266 = vxor.u32 %v261, 2147483648
    %v267 = vsel %vm265, %v260, %v266
    %vm268 = vcmp.eq.s32.totalorder %v263, 2
    %v269 = vxor.u32 %v260, 2147483648
    %v270 = vsel %vm268, %v269, %v261
    %v271 = vsel %vm264, %v267, %v270
    %v272 = vsel %vm262, nan, %v271
    %v273 = vsel %vm52, 1, 0
    %vm274 = vcmp.eq.s32.totalorder %v273, 1
    %v275 = vsel %vm274, %v169, %v272
    %v276 = vpack.c.bf16 %v275, %v275
    %v277 = vld [vmem:[#allocation2] sm:$0xff]
    %v278 = vld [vmem:[#allocation2 + $0x8] sm:$0xff]
    %v279 = vld [vmem:[#allocation2 + $0x10] sm:$0xff]
    %v280 = vld [vmem:[#allocation2 + $0x18] sm:$0xff]
    %v281 = vld [vmem:[#allocation2 + $0x20] sm:$0xff]
    %v282 = vld [vmem:[#allocation2 + $0x28] sm:$0xff]
    %v283 = vld [vmem:[#allocation2 + $0x30] sm:$0xff]
    %v284 = vld [vmem:[#allocation2 + $0x38] sm:$0xff]
    %v285 = vld [vmem:[#allocation2 + $0x40] sm:$0xff]
    %v286 = vld [vmem:[#allocation2 + $0x48] sm:$0xff]
    %v287 = vld [vmem:[#allocation2 + $0x50] sm:$0xff]
    %v288 = vld [vmem:[#allocation2 + $0x58] sm:$0xff]
    %v289 = vld [vmem:[#allocation2 + $0x60] sm:$0xff]
    %v290 = vld [vmem:[#allocation2 + $0x68] sm:$0xff]
    %v291 = vld [vmem:[#allocation2 + $0x70] sm:$0xff]
    %v292 = vld [vmem:[#allocation2 + $0x78] sm:$0xff]
    %v293 = vld [vmem:[#allocation2 + $0x80] sm:$0xff]
    %v294 = vld [vmem:[#allocation2 + $0x88] sm:$0xff]
    %v295 = vld [vmem:[#allocation2 + $0x90] sm:$0xff]
    %v296 = vld [vmem:[#allocation2 + $0x98] sm:$0xff]
    %v297 = vld [vmem:[#allocation2 + $0xa0] sm:$0xff]
    %v298 = vld [vmem:[#allocation2 + $0xa8] sm:$0xff]
    %v299 = vld [vmem:[#allocation2 + $0xb0] sm:$0xff]
    %v300 = vld [vmem:[#allocation2 + $0xb8] sm:$0xff]
    %v301 = vld [vmem:[#allocation2 + $0xc0] sm:$0xff]
    %v302 = vld [vmem:[#allocation2 + $0xc8] sm:$0xff]
    %v303 = vld [vmem:[#allocation2 + $0xd0] sm:$0xff]
    %v304 = vld [vmem:[#allocation2 + $0xd8] sm:$0xff]
    %v305 = vld [vmem:[#allocation2 + $0xe0] sm:$0xff]
    %v306 = vld [vmem:[#allocation2 + $0xe8] sm:$0xff]
    %v307 = vld [vmem:[#allocation2 + $0xf0] sm:$0xff]
    %v308 = vld [vmem:[#allocation2 + $0xf8] sm:$0xff]
    %v309 = vld [vmem:[%s2] sm:$0xf]
    %v311 = vlaneseq
    %v312 = vshrl.u32 %v311, 7
    %v313 = vsub.s32 0, %v312
    %v314 = vrot.slane %v309, %v313
    %v315 = vlaneseq
    %v316 = vshrl.u32 %v315, 7
    %v317 = vsub.s32 1, %v316
    %v318 = vrot.slane %v309, %v317
    %v319 = vlaneseq
    %v320 = vshrl.u32 %v319, 7
    %v321 = vsub.s32 2, %v320
    %v322 = vrot.slane %v309, %v321
    %v323 = vlaneseq
    %v324 = vshrl.u32 %v323, 7
    %v325 = vsub.s32 3, %v324
    %v326 = vrot.slane %v309, %v325
    %v363 = vunpack.c.l.b16 %v277
    %v364 = vunpack.c.h.b16 %v277
    %v365 = vunpack.c.l.b16 %v278
    %v366 = vunpack.c.h.b16 %v278
    %v367 = vunpack.c.l.b16 %v279
    %v368 = vunpack.c.h.b16 %v279
    %v369 = vunpack.c.l.b16 %v280
    %v370 = vunpack.c.h.b16 %v280
    %v371 = vunpack.c.l.b16 %v281
    %v372 = vunpack.c.h.b16 %v281
    %v373 = vunpack.c.l.b16 %v282
    %v374 = vunpack.c.h.b16 %v282
    %v375 = vunpack.c.l.b16 %v283
    %v376 = vunpack.c.h.b16 %v283
    %v377 = vunpack.c.l.b16 %v284
    %v378 = vunpack.c.h.b16 %v284
    %v379 = vunpack.c.l.b16 %v285
    %v380 = vunpack.c.h.b16 %v285
    %v381 = vunpack.c.l.b16 %v286
    %v382 = vunpack.c.h.b16 %v286
    %v383 = vunpack.c.l.b16 %v287
    %v384 = vunpack.c.h.b16 %v287
    %v385 = vunpack.c.l.b16 %v288
    %v386 = vunpack.c.h.b16 %v288
    %v387 = vunpack.c.l.b16 %v289
    %v388 = vunpack.c.h.b16 %v289
    %v389 = vunpack.c.l.b16 %v290
    %v390 = vunpack.c.h.b16 %v290
    %v391 = vunpack.c.l.b16 %v291
    %v392 = vunpack.c.h.b16 %v291
    %v393 = vunpack.c.l.b16 %v292
    %v394 = vunpack.c.h.b16 %v292
    %v395 = vunpack.c.l.b16 %v293
    %v396 = vunpack.c.h.b16 %v293
    %v397 = vunpack.c.l.b16 %v294
    %v398 = vunpack.c.h.b16 %v294
    %v399 = vunpack.c.l.b16 %v295
    %v400 = vunpack.c.h.b16 %v295
    %v401 = vunpack.c.l.b16 %v296
    %v402 = vunpack.c.h.b16 %v296
    %v403 = vunpack.c.l.b16 %v297
    %v404 = vunpack.c.h.b16 %v297
    %v405 = vunpack.c.l.b16 %v298
    %v406 = vunpack.c.h.b16 %v298
    %v407 = vunpack.c.l.b16 %v299
    %v408 = vunpack.c.h.b16 %v299
    %v409 = vunpack.c.l.b16 %v300
    %v410 = vunpack.c.h.b16 %v300
    %v411 = vunpack.c.l.b16 %v301
    %v412 = vunpack.c.h.b16 %v301
    %v413 = vunpack.c.l.b16 %v302
    %v414 = vunpack.c.h.b16 %v302
    %v415 = vunpack.c.l.b16 %v303
    %v416 = vunpack.c.h.b16 %v303
    %v417 = vunpack.c.l.b16 %v304
    %v418 = vunpack.c.h.b16 %v304
    %v419 = vunpack.c.l.b16 %v305
    %v420 = vunpack.c.h.b16 %v305
    %v421 = vunpack.c.l.b16 %v306
    %v422 = vunpack.c.h.b16 %v306
    %v423 = vunpack.c.l.b16 %v307
    %v424 = vunpack.c.h.b16 %v307
    %v425 = vunpack.c.l.b16 %v308
    %v426 = vunpack.c.h.b16 %v308
    %v427 = vpack.c.b16 %v367, %v363
    %v428 = vpack.c.b16 %v368, %v364
    %v429 = vpack.c.b16 %v369, %v365
    %v430 = vpack.c.b16 %v370, %v366
    %v431 = vpack.c.b16 %v375, %v371
    %v432 = vpack.c.b16 %v376, %v372
    %v433 = vpack.c.b16 %v377, %v373
    %v434 = vpack.c.b16 %v378, %v374
    %v435 = vpack.c.b16 %v383, %v379
    %v436 = vpack.c.b16 %v384, %v380
    %v437 = vpack.c.b16 %v385, %v381
    %v438 = vpack.c.b16 %v386, %v382
    %v439 = vpack.c.b16 %v391, %v387
    %v440 = vpack.c.b16 %v392, %v388
    %v441 = vpack.c.b16 %v393, %v389
    %v442 = vpack.c.b16 %v394, %v390
    %v443 = vpack.c.b16 %v399, %v395
    %v444 = vpack.c.b16 %v400, %v396
    %v445 = vpack.c.b16 %v401, %v397
    %v446 = vpack.c.b16 %v402, %v398
    %v447 = vpack.c.b16 %v407, %v403
    %v448 = vpack.c.b16 %v408, %v404
    %v449 = vpack.c.b16 %v409, %v405
    %v450 = vpack.c.b16 %v410, %v406
    %v451 = vpack.c.b16 %v415, %v411
    %v452 = vpack.c.b16 %v416, %v412
    %v453 = vpack.c.b16 %v417, %v413
    %v454 = vpack.c.b16 %v418, %v414
    %v455 = vpack.c.b16 %v423, %v419
    %v456 = vpack.c.b16 %v424, %v420
    %v457 = vpack.c.b16 %v425, %v421
    %v458 = vpack.c.b16 %v426, %v422
    %491 = vmatprep.subr.bf16.mxu0 %v428
    %492 = vmatpush1.bf16.msra.mxu0 %v427
    %493 = vmatprep.subr.bf16.mxu0 %v432
    %494 = vmatpush1.bf16.msra.mxu0 %v431
    %495 = vmatprep.subr.bf16.mxu0 %v436
    %496 = vmatpush1.bf16.msra.mxu0 %v435
    %497 = vmatprep.subr.bf16.mxu0 %v440
    %498 = vmatpush1.bf16.msra.mxu0 %v439
    %499 = vmatprep.subr.bf16.mxu0 %v444
    %500 = vmatpush1.bf16.msra.mxu0 %v443
    %501 = vmatprep.subr.bf16.mxu0 %v448
    %502 = vmatpush1.bf16.msra.mxu0 %v447
    %503 = vmatprep.subr.bf16.mxu0 %v452
    %504 = vmatpush1.bf16.msra.mxu0 %v451
    %505 = vmatprep.subr.bf16.mxu0 %v456
    %506 = vmatpush1.bf16.msra.mxu0 %v455
    %507 = vmatprep.subr.bf16.mxu0 0
    %508 = vmatpush1.bf16.msra.mxu0 0
    %509 = vmatprep.subr.bf16.mxu0 0
    %510 = vmatpush1.bf16.msra.mxu0 0
    %511 = vmatprep.subr.bf16.mxu0 0
    %512 = vmatpush1.bf16.msra.mxu0 0
    %513 = vmatprep.subr.bf16.mxu0 0
    %514 = vmatpush1.bf16.msra.mxu0 0
    %515 = vmatprep.subr.bf16.mxu0 0
    %516 = vmatpush1.bf16.msra.mxu0 0
    %517 = vmatprep.subr.bf16.mxu0 0
    %518 = vmatpush1.bf16.msra.mxu0 0
    %519 = vmatprep.subr.bf16.mxu0 0
    %520 = vmatpush1.bf16.msra.mxu0 0
    %521 = vmatprep.subr.bf16.mxu0 0
    %522 = vmatpush1.bf16.msra.mxu0 0
    %523 = vmatprep.mubr.bf16.mxu0 0
    %524 = vmatmul.mubr.bf16.gmra.mrb[0].mxu0 %v276
    %v525 = vpop.f32.mrb[0].mxu0
    %v526 = vadd.f32 %v314, %v525
    %v527 = vpop.f32.mrb[0].mxu0
    %v528 = vadd.f32 %v318, %v527
    %v529 = vpop.f32.mrb[0].mxu0
    %v530 = vpop.f32.mrb[0].mxu0
    %531 = vdwg.mxu0
    %532 = vmatprep.subr.bf16.mxu0 %v430
    %533 = vmatpush1.bf16.msra.mxu0 %v429
    %534 = vmatprep.subr.bf16.mxu0 %v434
    %535 = vmatpush1.bf16.msra.mxu0 %v433
    %536 = vmatprep.subr.bf16.mxu0 %v438
    %537 = vmatpush1.bf16.msra.mxu0 %v437
    %538 = vmatprep.subr.bf16.mxu0 %v442
    %539 = vmatpush1.bf16.msra.mxu0 %v441
    %540 = vmatprep.subr.bf16.mxu0 %v446
    %541 = vmatpush1.bf16.msra.mxu0 %v445
    %542 = vmatprep.subr.bf16.mxu0 %v450
    %543 = vmatpush1.bf16.msra.mxu0 %v449
    %544 = vmatprep.subr.bf16.mxu0 %v454
    %545 = vmatpush1.bf16.msra.mxu0 %v453
    %546 = vmatprep.subr.bf16.mxu0 %v458
    %547 = vmatpush1.bf16.msra.mxu0 %v457
    %548 = vmatprep.subr.bf16.mxu0 0
    %549 = vmatpush1.bf16.msra.mxu0 0
    %550 = vmatprep.subr.bf16.mxu0 0
    %551 = vmatpush1.bf16.msra.mxu0 0
    %552 = vmatprep.subr.bf16.mxu0 0
    %553 = vmatpush1.bf16.msra.mxu0 0
    %554 = vmatprep.subr.bf16.mxu0 0
    %555 = vmatpush1.bf16.msra.mxu0 0
    %556 = vmatprep.subr.bf16.mxu0 0
    %557 = vmatpush1.bf16.msra.mxu0 0
    %558 = vmatprep.subr.bf16.mxu0 0
    %559 = vmatpush1.bf16.msra.mxu0 0
    %560 = vmatprep.subr.bf16.mxu0 0
    %561 = vmatpush1.bf16.msra.mxu0 0
    %562 = vmatprep.subr.bf16.mxu0 0
    %563 = vmatpush1.bf16.msra.mxu0 0
    %564 = vmatprep.mubr.bf16.mxu0 0
    %565 = vmatmul.mubr.bf16.gmra.mrb[0].mxu0 %v276
    %v566 = vpop.f32.mrb[0].mxu0
    %v567 = vadd.f32 %v322, %v566
    %v568 = vpop.f32.mrb[0].mxu0
    %v569 = vadd.f32 %v326, %v568
    %v570 = vpop.f32.mrb[0].mxu0
    %v571 = vpop.f32.mrb[0].mxu0
    %572 = vdwg.mxu0
    %v573 = vxor.u32 %v526, 2147483648
    %v574 = vxor.u32 %v528, 2147483648
    %v575 = vxor.u32 %v567, 2147483648
    %v576 = vxor.u32 %v569, 2147483648
    %v577 = vmul.f32 %v573, 1.442695
    %v578 = vpow.pop %v577
    %v579 = vmul.f32 %v574, 1.442695
    %v580 = vpow.pop %v579
    %v581 = vmul.f32 %v575, 1.442695
    %v582 = vpow.pop %v581
    %v583 = vmul.f32 %v576, 1.442695
    %v584 = vpow.pop %v583
    %v585 = vadd.f32 %v578, 1.0
    %v586 = vadd.f32 %v580, 1.0
    %v587 = vadd.f32 %v582, 1.0
    %v588 = vadd.f32 %v584, 1.0
    %v589 = vrcp.pop %v585
    %v590 = vmul.f32 1.0, %v589
    %v591 = vrcp.pop %v586
    %v592 = vmul.f32 1.0, %v591
    %v593 = vrcp.pop %v587
    %v594 = vmul.f32 1.0, %v593
    %v595 = vrcp.pop %v588
    %v596 = vmul.f32 1.0, %v595
    %v597 = vmul.f32 %v526, %v590
    %v598 = vmul.f32 %v528, %v592
    %v599 = vmul.f32 %v567, %v594
    %v600 = vmul.f32 %v569, %v596
    %v601 = vpack.c.bf16 %v597, %v597
    %v602 = vpack.c.bf16 %v598, %v598
    %v603 = vpack.c.bf16 %v599, %v599
    %v604 = vpack.c.bf16 %v600, %v600
    %v605 = vld [vmem:[#allocation5] sm:$0xff]
    %v606 = vld [vmem:[#allocation5 + $0x8] sm:$0xff]
    %v607 = vld [vmem:[#allocation5 + $0x10] sm:$0xff]
    %v608 = vld [vmem:[#allocation5 + $0x18] sm:$0xff]
    %v609 = vld [vmem:[#allocation5 + $0x20] sm:$0xff]
    %v610 = vld [vmem:[#allocation5 + $0x28] sm:$0xff]
    %v611 = vld [vmem:[#allocation5 + $0x30] sm:$0xff]
    %v612 = vld [vmem:[#allocation5 + $0x38] sm:$0xff]
    %v613 = vld [vmem:[#allocation5 + $0x40] sm:$0xff]
    %v614 = vld [vmem:[#allocation5 + $0x48] sm:$0xff]
    %v615 = vld [vmem:[#allocation5 + $0x50] sm:$0xff]
    %v616 = vld [vmem:[#allocation5 + $0x58] sm:$0xff]
    %v617 = vld [vmem:[#allocation5 + $0x60] sm:$0xff]
    %v618 = vld [vmem:[#allocation5 + $0x68] sm:$0xff]
    %v619 = vld [vmem:[#allocation5 + $0x70] sm:$0xff]
    %v620 = vld [vmem:[#allocation5 + $0x78] sm:$0xff]
    %v621 = vld [vmem:[#allocation5 + $0x80] sm:$0xff]
    %v622 = vld [vmem:[#allocation5 + $0x88] sm:$0xff]
    %v623 = vld [vmem:[#allocation5 + $0x90] sm:$0xff]
    %v624 = vld [vmem:[#allocation5 + $0x98] sm:$0xff]
    %v625 = vld [vmem:[#allocation5 + $0xa0] sm:$0xff]
    %v626 = vld [vmem:[#allocation5 + $0xa8] sm:$0xff]
    %v627 = vld [vmem:[#allocation5 + $0xb0] sm:$0xff]
    %v628 = vld [vmem:[#allocation5 + $0xb8] sm:$0xff]
    %v629 = vld [vmem:[#allocation5 + $0xc0] sm:$0xff]
    %v630 = vld [vmem:[#allocation5 + $0xc8] sm:$0xff]
    %v631 = vld [vmem:[#allocation5 + $0xd0] sm:$0xff]
    %v632 = vld [vmem:[#allocation5 + $0xd8] sm:$0xff]
    %v633 = vld [vmem:[#allocation5 + $0xe0] sm:$0xff]
    %v634 = vld [vmem:[#allocation5 + $0xe8] sm:$0xff]
    %v635 = vld [vmem:[#allocation5 + $0xf0] sm:$0xff]
    %v636 = vld [vmem:[#allocation5 + $0xf8] sm:$0xff]
    %v637 = vld [vmem:[#allocation5 + $0x100] sm:$0xff]
    %v638 = vld [vmem:[#allocation5 + $0x108] sm:$0xff]
    %v639 = vld [vmem:[#allocation5 + $0x110] sm:$0xff]
    %v640 = vld [vmem:[#allocation5 + $0x118] sm:$0xff]
    %v641 = vld [vmem:[#allocation5 + $0x120] sm:$0xff]
    %v642 = vld [vmem:[#allocation5 + $0x128] sm:$0xff]
    %v643 = vld [vmem:[#allocation5 + $0x130] sm:$0xff]
    %v644 = vld [vmem:[#allocation5 + $0x138] sm:$0xff]
    %v645 = vld [vmem:[#allocation5 + $0x140] sm:$0xff]
    %v646 = vld [vmem:[#allocation5 + $0x148] sm:$0xff]
    %v647 = vld [vmem:[#allocation5 + $0x150] sm:$0xff]
    %v648 = vld [vmem:[#allocation5 + $0x158] sm:$0xff]
    %v649 = vld [vmem:[#allocation5 + $0x160] sm:$0xff]
    %v650 = vld [vmem:[#allocation5 + $0x168] sm:$0xff]
    %v651 = vld [vmem:[#allocation5 + $0x170] sm:$0xff]
    %v652 = vld [vmem:[#allocation5 + $0x178] sm:$0xff]
    %v653 = vld [vmem:[#allocation5 + $0x180] sm:$0xff]
    %v654 = vld [vmem:[#allocation5 + $0x188] sm:$0xff]
    %v655 = vld [vmem:[#allocation5 + $0x190] sm:$0xff]
    %v656 = vld [vmem:[#allocation5 + $0x198] sm:$0xff]
    %v657 = vld [vmem:[#allocation5 + $0x1a0] sm:$0xff]
    %v658 = vld [vmem:[#allocation5 + $0x1a8] sm:$0xff]
    %v659 = vld [vmem:[#allocation5 + $0x1b0] sm:$0xff]
    %v660 = vld [vmem:[#allocation5 + $0x1b8] sm:$0xff]
    %v661 = vld [vmem:[#allocation5 + $0x1c0] sm:$0xff]
    %v662 = vld [vmem:[#allocation5 + $0x1c8] sm:$0xff]
    %v663 = vld [vmem:[#allocation5 + $0x1d0] sm:$0xff]
    %v664 = vld [vmem:[#allocation5 + $0x1d8] sm:$0xff]
    %v665 = vld [vmem:[#allocation5 + $0x1e0] sm:$0xff]
    %v666 = vld [vmem:[#allocation5 + $0x1e8] sm:$0xff]
    %v667 = vld [vmem:[#allocation5 + $0x1f0] sm:$0xff]
    %v668 = vld [vmem:[#allocation5 + $0x1f8] sm:$0xff]
    %v669 = vld [vmem:[#allocation5 + $0x200] sm:$0xff]
    %v670 = vld [vmem:[#allocation5 + $0x208] sm:$0xff]
    %v671 = vld [vmem:[#allocation5 + $0x210] sm:$0xff]
    %v672 = vld [vmem:[#allocation5 + $0x218] sm:$0xff]
    %v673 = vld [vmem:[#allocation5 + $0x220] sm:$0xff]
    %v674 = vld [vmem:[#allocation5 + $0x228] sm:$0xff]
    %v675 = vld [vmem:[#allocation5 + $0x230] sm:$0xff]
    %v676 = vld [vmem:[#allocation5 + $0x238] sm:$0xff]
    %v677 = vld [vmem:[#allocation5 + $0x240] sm:$0xff]
    %v678 = vld [vmem:[#allocation5 + $0x248] sm:$0xff]
    %v679 = vld [vmem:[#allocation5 + $0x250] sm:$0xff]
    %v680 = vld [vmem:[#allocation5 + $0x258] sm:$0xff]
    %v681 = vld [vmem:[#allocation5 + $0x260] sm:$0xff]
    %v682 = vld [vmem:[#allocation5 + $0x268] sm:$0xff]
    %v683 = vld [vmem:[#allocation5 + $0x270] sm:$0xff]
    %v684 = vld [vmem:[#allocation5 + $0x278] sm:$0xff]
    %v685 = vld [vmem:[#allocation5 + $0x280] sm:$0xff]
    %v686 = vld [vmem:[#allocation5 + $0x288] sm:$0xff]
    %v687 = vld [vmem:[#allocation5 + $0x290] sm:$0xff]
    %v688 = vld [vmem:[#allocation5 + $0x298] sm:$0xff]
    %v689 = vld [vmem:[#allocation5 + $0x2a0] sm:$0xff]
    %v690 = vld [vmem:[#allocation5 + $0x2a8] sm:$0xff]
    %v691 = vld [vmem:[#allocation5 + $0x2b0] sm:$0xff]
    %v692 = vld [vmem:[#allocation5 + $0x2b8] sm:$0xff]
    %v693 = vld [vmem:[#allocation5 + $0x2c0] sm:$0xff]
    %v694 = vld [vmem:[#allocation5 + $0x2c8] sm:$0xff]
    %v695 = vld [vmem:[#allocation5 + $0x2d0] sm:$0xff]
    %v696 = vld [vmem:[#allocation5 + $0x2d8] sm:$0xff]
    %v697 = vld [vmem:[#allocation5 + $0x2e0] sm:$0xff]
    %v698 = vld [vmem:[#allocation5 + $0x2e8] sm:$0xff]
    %v699 = vld [vmem:[#allocation5 + $0x2f0] sm:$0xff]
    %v700 = vld [vmem:[#allocation5 + $0x2f8] sm:$0xff]
    %v701 = vld [vmem:[#allocation5 + $0x300] sm:$0xff]
    %v702 = vld [vmem:[#allocation5 + $0x308] sm:$0xff]
    %v703 = vld [vmem:[#allocation5 + $0x310] sm:$0xff]
    %v704 = vld [vmem:[#allocation5 + $0x318] sm:$0xff]
    %v705 = vld [vmem:[#allocation5 + $0x320] sm:$0xff]
    %v706 = vld [vmem:[#allocation5 + $0x328] sm:$0xff]
    %v707 = vld [vmem:[#allocation5 + $0x330] sm:$0xff]
    %v708 = vld [vmem:[#allocation5 + $0x338] sm:$0xff]
    %v709 = vld [vmem:[#allocation5 + $0x340] sm:$0xff]
    %v710 = vld [vmem:[#allocation5 + $0x348] sm:$0xff]
    %v711 = vld [vmem:[#allocation5 + $0x350] sm:$0xff]
    %v712 = vld [vmem:[#allocation5 + $0x358] sm:$0xff]
    %v713 = vld [vmem:[#allocation5 + $0x360] sm:$0xff]
    %v714 = vld [vmem:[#allocation5 + $0x368] sm:$0xff]
    %v715 = vld [vmem:[#allocation5 + $0x370] sm:$0xff]
    %v716 = vld [vmem:[#allocation5 + $0x378] sm:$0xff]
    %v717 = vld [vmem:[#allocation5 + $0x380] sm:$0xff]
    %v718 = vld [vmem:[#allocation5 + $0x388] sm:$0xff]
    %v719 = vld [vmem:[#allocation5 + $0x390] sm:$0xff]
    %v720 = vld [vmem:[#allocation5 + $0x398] sm:$0xff]
    %v721 = vld [vmem:[#allocation5 + $0x3a0] sm:$0xff]
    %v722 = vld [vmem:[#allocation5 + $0x3a8] sm:$0xff]
    %v723 = vld [vmem:[#allocation5 + $0x3b0] sm:$0xff]
    %v724 = vld [vmem:[#allocation5 + $0x3b8] sm:$0xff]
    %v725 = vld [vmem:[#allocation5 + $0x3c0] sm:$0xff]
    %v726 = vld [vmem:[#allocation5 + $0x3c8] sm:$0xff]
    %v727 = vld [vmem:[#allocation5 + $0x3d0] sm:$0xff]
    %v728 = vld [vmem:[#allocation5 + $0x3d8] sm:$0xff]
    %v729 = vld [vmem:[#allocation5 + $0x3e0] sm:$0xff]
    %v730 = vld [vmem:[#allocation5 + $0x3e8] sm:$0xff]
    %v731 = vld [vmem:[#allocation5 + $0x3f0] sm:$0xff]
    %v732 = vld [vmem:[#allocation5 + $0x3f8] sm:$0xff]
    %v733 = vld [vmem:[%s4] sm:$0xf]
    %v735 = vlaneseq
    %v736 = vshrl.u32 %v735, 7
    %v737 = vsub.s32 0, %v736
    %v738 = vrot.slane %v733, %v737
    %v739 = vlaneseq
    %v740 = vshrl.u32 %v739, 7
    %v741 = vsub.s32 1, %v740
    %v742 = vrot.slane %v733, %v741
    %v743 = vlaneseq
    %v744 = vshrl.u32 %v743, 7
    %v745 = vsub.s32 2, %v744
    %v746 = vrot.slane %v733, %v745
    %v747 = vlaneseq
    %v748 = vshrl.u32 %v747, 7
    %v749 = vsub.s32 3, %v748
    %v750 = vrot.slane %v733, %v749
    %v883 = vunpack.c.l.b16 %v605
    %v884 = vunpack.c.h.b16 %v605
    %v885 = vunpack.c.l.b16 %v606
    %v886 = vunpack.c.h.b16 %v606
    %v887 = vunpack.c.l.b16 %v607
    %v888 = vunpack.c.h.b16 %v607
    %v889 = vunpack.c.l.b16 %v608
    %v890 = vunpack.c.h.b16 %v608
    %v891 = vunpack.c.l.b16 %v609
    %v892 = vunpack.c.h.b16 %v609
    %v893 = vunpack.c.l.b16 %v610
    %v894 = vunpack.c.h.b16 %v610
    %v895 = vunpack.c.l.b16 %v611
    %v896 = vunpack.c.h.b16 %v611
    %v897 = vunpack.c.l.b16 %v612
    %v898 = vunpack.c.h.b16 %v612
    %v899 = vunpack.c.l.b16 %v613
    %v900 = vunpack.c.h.b16 %v613
    %v901 = vunpack.c.l.b16 %v614
    %v902 = vunpack.c.h.b16 %v614
    %v903 = vunpack.c.l.b16 %v615
    %v904 = vunpack.c.h.b16 %v615
    %v905 = vunpack.c.l.b16 %v616
    %v906 = vunpack.c.h.b16 %v616
    %v907 = vunpack.c.l.b16 %v617
    %v908 = vunpack.c.h.b16 %v617
    %v909 = vunpack.c.l.b16 %v618
    %v910 = vunpack.c.h.b16 %v618
    %v911 = vunpack.c.l.b16 %v619
    %v912 = vunpack.c.h.b16 %v619
    %v913 = vunpack.c.l.b16 %v620
    %v914 = vunpack.c.h.b16 %v620
    %v915 = vunpack.c.l.b16 %v621
    %v916 = vunpack.c.h.b16 %v621
    %v917 = vunpack.c.l.b16 %v622
    %v918 = vunpack.c.h.b16 %v622
    %v919 = vunpack.c.l.b16 %v623
    %v920 = vunpack.c.h.b16 %v623
    %v921 = vunpack.c.l.b16 %v624
    %v922 = vunpack.c.h.b16 %v624
    %v923 = vunpack.c.l.b16 %v625
    %v924 = vunpack.c.h.b16 %v625
    %v925 = vunpack.c.l.b16 %v626
    %v926 = vunpack.c.h.b16 %v626
    %v927 = vunpack.c.l.b16 %v627
    %v928 = vunpack.c.h.b16 %v627
    %v929 = vunpack.c.l.b16 %v628
    %v930 = vunpack.c.h.b16 %v628
    %v931 = vunpack.c.l.b16 %v629
    %v932 = vunpack.c.h.b16 %v629
    %v933 = vunpack.c.l.b16 %v630
    %v934 = vunpack.c.h.b16 %v630
    %v935 = vunpack.c.l.b16 %v631
    %v936 = vunpack.c.h.b16 %v631
    %v937 = vunpack.c.l.b16 %v632
    %v938 = vunpack.c.h.b16 %v632
    %v939 = vunpack.c.l.b16 %v633
    %v940 = vunpack.c.h.b16 %v633
    %v941 = vunpack.c.l.b16 %v634
    %v942 = vunpack.c.h.b16 %v634
    %v943 = vunpack.c.l.b16 %v635
    %v944 = vunpack.c.h.b16 %v635
    %v945 = vunpack.c.l.b16 %v636
    %v946 = vunpack.c.h.b16 %v636
    %v947 = vunpack.c.l.b16 %v637
    %v948 = vunpack.c.h.b16 %v637
    %v949 = vunpack.c.l.b16 %v638
    %v950 = vunpack.c.h.b16 %v638
    %v951 = vunpack.c.l.b16 %v639
    %v952 = vunpack.c.h.b16 %v639
    %v953 = vunpack.c.l.b16 %v640
    %v954 = vunpack.c.h.b16 %v640
    %v955 = vunpack.c.l.b16 %v641
    %v956 = vunpack.c.h.b16 %v641
    %v957 = vunpack.c.l.b16 %v642
    %v958 = vunpack.c.h.b16 %v642
    %v959 = vunpack.c.l.b16 %v643
    %v960 = vunpack.c.h.b16 %v643
    %v961 = vunpack.c.l.b16 %v644
    %v962 = vunpack.c.h.b16 %v644
    %v963 = vunpack.c.l.b16 %v645
    %v964 = vunpack.c.h.b16 %v645
    %v965 = vunpack.c.l.b16 %v646
    %v966 = vunpack.c.h.b16 %v646
    %v967 = vunpack.c.l.b16 %v647
    %v968 = vunpack.c.h.b16 %v647
    %v969 = vunpack.c.l.b16 %v648
    %v970 = vunpack.c.h.b16 %v648
    %v971 = vunpack.c.l.b16 %v649
    %v972 = vunpack.c.h.b16 %v649
    %v973 = vunpack.c.l.b16 %v650
    %v974 = vunpack.c.h.b16 %v650
    %v975 = vunpack.c.l.b16 %v651
    %v976 = vunpack.c.h.b16 %v651
    %v977 = vunpack.c.l.b16 %v652
    %v978 = vunpack.c.h.b16 %v652
    %v979 = vunpack.c.l.b16 %v653
    %v980 = vunpack.c.h.b16 %v653
    %v981 = vunpack.c.l.b16 %v654
    %v982 = vunpack.c.h.b16 %v654
    %v983 = vunpack.c.l.b16 %v655
    %v984 = vunpack.c.h.b16 %v655
    %v985 = vunpack.c.l.b16 %v656
    %v986 = vunpack.c.h.b16 %v656
    %v987 = vunpack.c.l.b16 %v657
    %v988 = vunpack.c.h.b16 %v657
    %v989 = vunpack.c.l.b16 %v658
    %v990 = vunpack.c.h.b16 %v658
    %v991 = vunpack.c.l.b16 %v659
    %v992 = vunpack.c.h.b16 %v659
    %v993 = vunpack.c.l.b16 %v660
    %v994 = vunpack.c.h.b16 %v660
    %v995 = vunpack.c.l.b16 %v661
    %v996 = vunpack.c.h.b16 %v661
    %v997 = vunpack.c.l.b16 %v662
    %v998 = vunpack.c.h.b16 %v662
    %v999 = vunpack.c.l.b16 %v663
    %v1000 = vunpack.c.h.b16 %v663
    %v1001 = vunpack.c.l.b16 %v664
    %v1002 = vunpack.c.h.b16 %v664
    %v1003 = vunpack.c.l.b16 %v665
    %v1004 = vunpack.c.h.b16 %v665
    %v1005 = vunpack.c.l.b16 %v666
    %v1006 = vunpack.c.h.b16 %v666
    %v1007 = vunpack.c.l.b16 %v667
    %v1008 = vunpack.c.h.b16 %v667
    %v1009 = vunpack.c.l.b16 %v668
    %v1010 = vunpack.c.h.b16 %v668
    %v1011 = vunpack.c.l.b16 %v669
    %v1012 = vunpack.c.h.b16 %v669
    %v1013 = vunpack.c.l.b16 %v670
    %v1014 = vunpack.c.h.b16 %v670
    %v1015 = vunpack.c.l.b16 %v671
    %v1016 = vunpack.c.h.b16 %v671
    %v1017 = vunpack.c.l.b16 %v672
    %v1018 = vunpack.c.h.b16 %v672
    %v1019 = vunpack.c.l.b16 %v673
    %v1020 = vunpack.c.h.b16 %v673
    %v1021 = vunpack.c.l.b16 %v674
    %v1022 = vunpack.c.h.b16 %v674
    %v1023 = vunpack.c.l.b16 %v675
    %v1024 = vunpack.c.h.b16 %v675
    %v1025 = vunpack.c.l.b16 %v676
    %v1026 = vunpack.c.h.b16 %v676
    %v1027 = vunpack.c.l.b16 %v677
    %v1028 = vunpack.c.h.b16 %v677
    %v1029 = vunpack.c.l.b16 %v678
    %v1030 = vunpack.c.h.b16 %v678
    %v1031 = vunpack.c.l.b16 %v679
    %v1032 = vunpack.c.h.b16 %v679
    %v1033 = vunpack.c.l.b16 %v680
    %v1034 = vunpack.c.h.b16 %v680
    %v1035 = vunpack.c.l.b16 %v681
    %v1036 = vunpack.c.h.b16 %v681
    %v1037 = vunpack.c.l.b16 %v682
    %v1038 = vunpack.c.h.b16 %v682
    %v1039 = vunpack.c.l.b16 %v683
    %v1040 = vunpack.c.h.b16 %v683
    %v1041 = vunpack.c.l.b16 %v684
    %v1042 = vunpack.c.h.b16 %v684
    %v1043 = vunpack.c.l.b16 %v685
    %v1044 = vunpack.c.h.b16 %v685
    %v1045 = vunpack.c.l.b16 %v686
    %v1046 = vunpack.c.h.b16 %v686
    %v1047 = vunpack.c.l.b16 %v687
    %v1048 = vunpack.c.h.b16 %v687
    %v1049 = vunpack.c.l.b16 %v688
    %v1050 = vunpack.c.h.b16 %v688
    %v1051 = vunpack.c.l.b16 %v689
    %v1052 = vunpack.c.h.b16 %v689
    %v1053 = vunpack.c.l.b16 %v690
    %v1054 = vunpack.c.h.b16 %v690
    %v1055 = vunpack.c.l.b16 %v691
    %v1056 = vunpack.c.h.b16 %v691
    %v1057 = vunpack.c.l.b16 %v692
    %v1058 = vunpack.c.h.b16 %v692
    %v1059 = vunpack.c.l.b16 %v693
    %v1060 = vunpack.c.h.b16 %v693
    %v1061 = vunpack.c.l.b16 %v694
    %v1062 = vunpack.c.h.b16 %v694
    %v1063 = vunpack.c.l.b16 %v695
    %v1064 = vunpack.c.h.b16 %v695
    %v1065 = vunpack.c.l.b16 %v696
    %v1066 = vunpack.c.h.b16 %v696
    %v1067 = vunpack.c.l.b16 %v697
    %v1068 = vunpack.c.h.b16 %v697
    %v1069 = vunpack.c.l.b16 %v698
    %v1070 = vunpack.c.h.b16 %v698
    %v1071 = vunpack.c.l.b16 %v699
    %v1072 = vunpack.c.h.b16 %v699
    %v1073 = vunpack.c.l.b16 %v700
    %v1074 = vunpack.c.h.b16 %v700
    %v1075 = vunpack.c.l.b16 %v701
    %v1076 = vunpack.c.h.b16 %v701
    %v1077 = vunpack.c.l.b16 %v702
    %v1078 = vunpack.c.h.b16 %v702
    %v1079 = vunpack.c.l.b16 %v703
    %v1080 = vunpack.c.h.b16 %v703
    %v1081 = vunpack.c.l.b16 %v704
    %v1082 = vunpack.c.h.b16 %v704
    %v1083 = vunpack.c.l.b16 %v705
    %v1084 = vunpack.c.h.b16 %v705
    %v1085 = vunpack.c.l.b16 %v706
    %v1086 = vunpack.c.h.b16 %v706
    %v1087 = vunpack.c.l.b16 %v707
    %v1088 = vunpack.c.h.b16 %v707
    %v1089 = vunpack.c.l.b16 %v708
    %v1090 = vunpack.c.h.b16 %v708
    %v1091 = vunpack.c.l.b16 %v709
    %v1092 = vunpack.c.h.b16 %v709
    %v1093 = vunpack.c.l.b16 %v710
    %v1094 = vunpack.c.h.b16 %v710
    %v1095 = vunpack.c.l.b16 %v711
    %v1096 = vunpack.c.h.b16 %v711
    %v1097 = vunpack.c.l.b16 %v712
    %v1098 = vunpack.c.h.b16 %v712
    %v1099 = vunpack.c.l.b16 %v713
    %v1100 = vunpack.c.h.b16 %v713
    %v1101 = vunpack.c.l.b16 %v714
    %v1102 = vunpack.c.h.b16 %v714
    %v1103 = vunpack.c.l.b16 %v715
    %v1104 = vunpack.c.h.b16 %v715
    %v1105 = vunpack.c.l.b16 %v716
    %v1106 = vunpack.c.h.b16 %v716
    %v1107 = vunpack.c.l.b16 %v717
    %v1108 = vunpack.c.h.b16 %v717
    %v1109 = vunpack.c.l.b16 %v718
    %v1110 = vunpack.c.h.b16 %v718
    %v1111 = vunpack.c.l.b16 %v719
    %v1112 = vunpack.c.h.b16 %v719
    %v1113 = vunpack.c.l.b16 %v720
    %v1114 = vunpack.c.h.b16 %v720
    %v1115 = vunpack.c.l.b16 %v721
    %v1116 = vunpack.c.h.b16 %v721
    %v1117 = vunpack.c.l.b16 %v722
    %v1118 = vunpack.c.h.b16 %v722
    %v1119 = vunpack.c.l.b16 %v723
    %v1120 = vunpack.c.h.b16 %v723
    %v1121 = vunpack.c.l.b16 %v724
    %v1122 = vunpack.c.h.b16 %v724
    %v1123 = vunpack.c.l.b16 %v725
    %v1124 = vunpack.c.h.b16 %v725
    %v1125 = vunpack.c.l.b16 %v726
    %v1126 = vunpack.c.h.b16 %v726
    %v1127 = vunpack.c.l.b16 %v727
    %v1128 = vunpack.c.h.b16 %v727
    %v1129 = vunpack.c.l.b16 %v728
    %v1130 = vunpack.c.h.b16 %v728
    %v1131 = vunpack.c.l.b16 %v729
    %v1132 = vunpack.c.h.b16 %v729
    %v1133 = vunpack.c.l.b16 %v730
    %v1134 = vunpack.c.h.b16 %v730
    %v1135 = vunpack.c.l.b16 %v731
    %v1136 = vunpack.c.h.b16 %v731
    %v1137 = vunpack.c.l.b16 %v732
    %v1138 = vunpack.c.h.b16 %v732
    %v1139 = vpack.c.b16 %v887, %v883
    %v1140 = vpack.c.b16 %v888, %v884
    %v1141 = vpack.c.b16 %v889, %v885
    %v1142 = vpack.c.b16 %v890, %v886
    %v1143 = vpack.c.b16 %v895, %v891
    %v1144 = vpack.c.b16 %v896, %v892
    %v1145 = vpack.c.b16 %v897, %v893
    %v1146 = vpack.c.b16 %v898, %v894
    %v1147 = vpack.c.b16 %v903, %v899
    %v1148 = vpack.c.b16 %v904, %v900
    %v1149 = vpack.c.b16 %v905, %v901
    %v1150 = vpack.c.b16 %v906, %v902
    %v1151 = vpack.c.b16 %v911, %v907
    %v1152 = vpack.c.b16 %v912, %v908
    %v1153 = vpack.c.b16 %v913, %v909
    %v1154 = vpack.c.b16 %v914, %v910
    %v1155 = vpack.c.b16 %v919, %v915
    %v1156 = vpack.c.b16 %v920, %v916
    %v1157 = vpack.c.b16 %v921, %v917
    %v1158 = vpack.c.b16 %v922, %v918
    %v1159 = vpack.c.b16 %v927, %v923
    %v1160 = vpack.c.b16 %v928, %v924
    %v1161 = vpack.c.b16 %v929, %v925
    %v1162 = vpack.c.b16 %v930, %v926
    %v1163 = vpack.c.b16 %v935, %v931
    %v1164 = vpack.c.b16 %v936, %v932
    %v1165 = vpack.c.b16 %v937, %v933
    %v1166 = vpack.c.b16 %v938, %v934
    %v1167 = vpack.c.b16 %v943, %v939
    %v1168 = vpack.c.b16 %v944, %v940
    %v1169 = vpack.c.b16 %v945, %v941
    %v1170 = vpack.c.b16 %v946, %v942
    %v1171 = vpack.c.b16 %v951, %v947
    %v1172 = vpack.c.b16 %v952, %v948
    %v1173 = vpack.c.b16 %v953, %v949
    %v1174 = vpack.c.b16 %v954, %v950
    %v1175 = vpack.c.b16 %v959, %v955
    %v1176 = vpack.c.b16 %v960, %v956
    %v1177 = vpack.c.b16 %v961, %v957
    %v1178 = vpack.c.b16 %v962, %v958
    %v1179 = vpack.c.b16 %v967, %v963
    %v1180 = vpack.c.b16 %v968, %v964
    %v1181 = vpack.c.b16 %v969, %v965
    %v1182 = vpack.c.b16 %v970, %v966
    %v1183 = vpack.c.b16 %v975, %v971
    %v1184 = vpack.c.b16 %v976, %v972
    %v1185 = vpack.c.b16 %v977, %v973
    %v1186 = vpack.c.b16 %v978, %v974
    %v1187 = vpack.c.b16 %v983, %v979
    %v1188 = vpack.c.b16 %v984, %v980
    %v1189 = vpack.c.b16 %v985, %v981
    %v1190 = vpack.c.b16 %v986, %v982
    %v1191 = vpack.c.b16 %v991, %v987
    %v1192 = vpack.c.b16 %v992, %v988
    %v1193 = vpack.c.b16 %v993, %v989
    %v1194 = vpack.c.b16 %v994, %v990
    %v1195 = vpack.c.b16 %v999, %v995
    %v1196 = vpack.c.b16 %v1000, %v996
    %v1197 = vpack.c.b16 %v1001, %v997
    %v1198 = vpack.c.b16 %v1002, %v998
    %v1199 = vpack.c.b16 %v1007, %v1003
    %v1200 = vpack.c.b16 %v1008, %v1004
    %v1201 = vpack.c.b16 %v1009, %v1005
    %v1202 = vpack.c.b16 %v1010, %v1006
    %v1203 = vpack.c.b16 %v1015, %v1011
    %v1204 = vpack.c.b16 %v1016, %v1012
    %v1205 = vpack.c.b16 %v1017, %v1013
    %v1206 = vpack.c.b16 %v1018, %v1014
    %v1207 = vpack.c.b16 %v1023, %v1019
    %v1208 = vpack.c.b16 %v1024, %v1020
    %v1209 = vpack.c.b16 %v1025, %v1021
    %v1210 = vpack.c.b16 %v1026, %v1022
    %v1211 = vpack.c.b16 %v1031, %v1027
    %v1212 = vpack.c.b16 %v1032, %v1028
    %v1213 = vpack.c.b16 %v1033, %v1029
    %v1214 = vpack.c.b16 %v1034, %v1030
    %v1215 = vpack.c.b16 %v1039, %v1035
    %v1216 = vpack.c.b16 %v1040, %v1036
    %v1217 = vpack.c.b16 %v1041, %v1037
    %v1218 = vpack.c.b16 %v1042, %v1038
    %v1219 = vpack.c.b16 %v1047, %v1043
    %v1220 = vpack.c.b16 %v1048, %v1044
    %v1221 = vpack.c.b16 %v1049, %v1045
    %v1222 = vpack.c.b16 %v1050, %v1046
    %v1223 = vpack.c.b16 %v1055, %v1051
    %v1224 = vpack.c.b16 %v1056, %v1052
    %v1225 = vpack.c.b16 %v1057, %v1053
    %v1226 = vpack.c.b16 %v1058, %v1054
    %v1227 = vpack.c.b16 %v1063, %v1059
    %v1228 = vpack.c.b16 %v1064, %v1060
    %v1229 = vpack.c.b16 %v1065, %v1061
    %v1230 = vpack.c.b16 %v1066, %v1062
    %v1231 = vpack.c.b16 %v1071, %v1067
    %v1232 = vpack.c.b16 %v1072, %v1068
    %v1233 = vpack.c.b16 %v1073, %v1069
    %v1234 = vpack.c.b16 %v1074, %v1070
    %v1235 = vpack.c.b16 %v1079, %v1075
    %v1236 = vpack.c.b16 %v1080, %v1076
    %v1237 = vpack.c.b16 %v1081, %v1077
    %v1238 = vpack.c.b16 %v1082, %v1078
    %v1239 = vpack.c.b16 %v1087, %v1083
    %v1240 = vpack.c.b16 %v1088, %v1084
    %v1241 = vpack.c.b16 %v1089, %v1085
    %v1242 = vpack.c.b16 %v1090, %v1086
    %v1243 = vpack.c.b16 %v1095, %v1091
    %v1244 = vpack.c.b16 %v1096, %v1092
    %v1245 = vpack.c.b16 %v1097, %v1093
    %v1246 = vpack.c.b16 %v1098, %v1094
    %v1247 = vpack.c.b16 %v1103, %v1099
    %v1248 = vpack.c.b16 %v1104, %v1100
    %v1249 = vpack.c.b16 %v1105, %v1101
    %v1250 = vpack.c.b16 %v1106, %v1102
    %v1251 = vpack.c.b16 %v1111, %v1107
    %v1252 = vpack.c.b16 %v1112, %v1108
    %v1253 = vpack.c.b16 %v1113, %v1109
    %v1254 = vpack.c.b16 %v1114, %v1110
    %v1255 = vpack.c.b16 %v1119, %v1115
    %v1256 = vpack.c.b16 %v1120, %v1116
    %v1257 = vpack.c.b16 %v1121, %v1117
    %v1258 = vpack.c.b16 %v1122, %v1118
    %v1259 = vpack.c.b16 %v1127, %v1123
    %v1260 = vpack.c.b16 %v1128, %v1124
    %v1261 = vpack.c.b16 %v1129, %v1125
    %v1262 = vpack.c.b16 %v1130, %v1126
    %v1263 = vpack.c.b16 %v1135, %v1131
    %v1264 = vpack.c.b16 %v1136, %v1132
    %v1265 = vpack.c.b16 %v1137, %v1133
    %v1266 = vpack.c.b16 %v1138, %v1134
    %1395 = vmatprep.subr.bf16.mxu0 %v1140
    %1396 = vmatpush1.bf16.msra.mxu0 %v1139
    %1397 = vmatprep.subr.bf16.mxu0 %v1144
    %1398 = vmatpush1.bf16.msra.mxu0 %v1143
    %1399 = vmatprep.subr.bf16.mxu0 %v1148
    %1400 = vmatpush1.bf16.msra.mxu0 %v1147
    %1401 = vmatprep.subr.bf16.mxu0 %v1152
    %1402 = vmatpush1.bf16.msra.mxu0 %v1151
    %1403 = vmatprep.subr.bf16.mxu0 %v1156
    %1404 = vmatpush1.bf16.msra.mxu0 %v1155
    %1405 = vmatprep.subr.bf16.mxu0 %v1160
    %1406 = vmatpush1.bf16.msra.mxu0 %v1159
    %1407 = vmatprep.subr.bf16.mxu0 %v1164
    %1408 = vmatpush1.bf16.msra.mxu0 %v1163
    %1409 = vmatprep.subr.bf16.mxu0 %v1168
    %1410 = vmatpush1.bf16.msra.mxu0 %v1167
    %1411 = vmatprep.subr.bf16.mxu0 %v1172
    %1412 = vmatpush1.bf16.msra.mxu0 %v1171
    %1413 = vmatprep.subr.bf16.mxu0 %v1176
    %1414 = vmatpush1.bf16.msra.mxu0 %v1175
    %1415 = vmatprep.subr.bf16.mxu0 %v1180
    %1416 = vmatpush1.bf16.msra.mxu0 %v1179
    %1417 = vmatprep.subr.bf16.mxu0 %v1184
    %1418 = vmatpush1.bf16.msra.mxu0 %v1183
    %1419 = vmatprep.subr.bf16.mxu0 %v1188
    %1420 = vmatpush1.bf16.msra.mxu0 %v1187
    %1421 = vmatprep.subr.bf16.mxu0 %v1192
    %1422 = vmatpush1.bf16.msra.mxu0 %v1191
    %1423 = vmatprep.subr.bf16.mxu0 %v1196
    %1424 = vmatpush1.bf16.msra.mxu0 %v1195
    %1425 = vmatprep.subr.bf16.mxu0 %v1200
    %1426 = vmatpush1.bf16.msra.mxu0 %v1199
    %1427 = vmatprep.mubr.bf16.mxu0 %v602
    %1428 = vmatmul.mubr.bf16.gmra.mrb[0].mxu0 %v601
    %v1429 = vpop.f32.mrb[0].mxu0
    %v1430 = vadd.f32 %v738, %v1429
    %v1431 = vpop.f32.mrb[0].mxu0
    %v1432 = vadd.f32 %v742, %v1431
    %v1433 = vpop.f32.mrb[0].mxu0
    %v1434 = vpop.f32.mrb[0].mxu0
    %1435 = vdwg.mxu0
    %1436 = vmatprep.subr.bf16.mxu0 %v1204
    %1437 = vmatpush1.bf16.msra.mxu0 %v1203
    %1438 = vmatprep.subr.bf16.mxu0 %v1208
    %1439 = vmatpush1.bf16.msra.mxu0 %v1207
    %1440 = vmatprep.subr.bf16.mxu0 %v1212
    %1441 = vmatpush1.bf16.msra.mxu0 %v1211
    %1442 = vmatprep.subr.bf16.mxu0 %v1216
    %1443 = vmatpush1.bf16.msra.mxu0 %v1215
    %1444 = vmatprep.subr.bf16.mxu0 %v1220
    %1445 = vmatpush1.bf16.msra.mxu0 %v1219
    %1446 = vmatprep.subr.bf16.mxu0 %v1224
    %1447 = vmatpush1.bf16.msra.mxu0 %v1223
    %1448 = vmatprep.subr.bf16.mxu0 %v1228
    %1449 = vmatpush1.bf16.msra.mxu0 %v1227
    %1450 = vmatprep.subr.bf16.mxu0 %v1232
    %1451 = vmatpush1.bf16.msra.mxu0 %v1231
    %1452 = vmatprep.subr.bf16.mxu0 %v1236
    %1453 = vmatpush1.bf16.msra.mxu0 %v1235
    %1454 = vmatprep.subr.bf16.mxu0 %v1240
    %1455 = vmatpush1.bf16.msra.mxu0 %v1239
    %1456 = vmatprep.subr.bf16.mxu0 %v1244
    %1457 = vmatpush1.bf16.msra.mxu0 %v1243
    %1458 = vmatprep.subr.bf16.mxu0 %v1248
    %1459 = vmatpush1.bf16.msra.mxu0 %v1247
    %1460 = vmatprep.subr.bf16.mxu0 %v1252
    %1461 = vmatpush1.bf16.msra.mxu0 %v1251
    %1462 = vmatprep.subr.bf16.mxu0 %v1256
    %1463 = vmatpush1.bf16.msra.mxu0 %v1255
    %1464 = vmatprep.subr.bf16.mxu0 %v1260
    %1465 = vmatpush1.bf16.msra.mxu0 %v1259
    %1466 = vmatprep.subr.bf16.mxu0 %v1264
    %1467 = vmatpush1.bf16.msra.mxu0 %v1263
    %1468 = vmatprep.mubr.bf16.mxu0 %v604
    %1469 = vmatmul.mubr.bf16.gmra.mrb[0].mxu0 %v603
    %v1470 = vpop.f32.mrb[0].mxu0
    %v1471 = vadd.f32 %v1430, %v1470
    %v1472 = vpop.f32.mrb[0].mxu0
    %v1473 = vadd.f32 %v1432, %v1472
    %v1474 = vpop.f32.mrb[0].mxu0
    %v1475 = vpop.f32.mrb[0].mxu0
    %1476 = vdwg.mxu0
    %1477 = vmatprep.subr.bf16.mxu0 %v1142
    %1478 = vmatpush1.bf16.msra.mxu0 %v1141
    %1479 = vmatprep.subr.bf16.mxu0 %v1146
    %1480 = vmatpush1.bf16.msra.mxu0 %v1145
    %1481 = vmatprep.subr.bf16.mxu0 %v1150
    %1482 = vmatpush1.bf16.msra.mxu0 %v1149
    %1483 = vmatprep.subr.bf16.mxu0 %v1154
    %1484 = vmatpush1.bf16.msra.mxu0 %v1153
    %1485 = vmatprep.subr.bf16.mxu0 %v1158
    %1486 = vmatpush1.bf16.msra.mxu0 %v1157
    %1487 = vmatprep.subr.bf16.mxu0 %v1162
    %1488 = vmatpush1.bf16.msra.mxu0 %v1161
    %1489 = vmatprep.subr.bf16.mxu0 %v1166
    %1490 = vmatpush1.bf16.msra.mxu0 %v1165
    %1491 = vmatprep.subr.bf16.mxu0 %v1170
    %1492 = vmatpush1.bf16.msra.mxu0 %v1169
    %1493 = vmatprep.subr.bf16.mxu0 %v1174
    %1494 = vmatpush1.bf16.msra.mxu0 %v1173
    %1495 = vmatprep.subr.bf16.mxu0 %v1178
    %1496 = vmatpush1.bf16.msra.mxu0 %v1177
    %1497 = vmatprep.subr.bf16.mxu0 %v1182
    %1498 = vmatpush1.bf16.msra.mxu0 %v1181
    %1499 = vmatprep.subr.bf16.mxu0 %v1186
    %1500 = vmatpush1.bf16.msra.mxu0 %v1185
    %1501 = vmatprep.subr.bf16.mxu0 %v1190
    %1502 = vmatpush1.bf16.msra.mxu0 %v1189
    %1503 = vmatprep.subr.bf16.mxu0 %v1194
    %1504 = vmatpush1.bf16.msra.mxu0 %v1193
    %1505 = vmatprep.subr.bf16.mxu0 %v1198
    %1506 = vmatpush1.bf16.msra.mxu0 %v1197
    %1507 = vmatprep.subr.bf16.mxu0 %v1202
    %1508 = vmatpush1.bf16.msra.mxu0 %v1201
    %1509 = vmatprep.mubr.bf16.mxu0 %v602
    %1510 = vmatmul.mubr.bf16.gmra.mrb[0].mxu0 %v601
    %v1511 = vpop.f32.mrb[0].mxu0
    %v1512 = vadd.f32 %v746, %v1511
    %v1513 = vpop.f32.mrb[0].mxu0
    %v1514 = vadd.f32 %v750, %v1513
    %v1515 = vpop.f32.mrb[0].mxu0
    %v1516 = vpop.f32.mrb[0].mxu0
    %1517 = vdwg.mxu0
    %1518 = vmatprep.subr.bf16.mxu0 %v1206
    %1519 = vmatpush1.bf16.msra.mxu0 %v1205
    %1520 = vmatprep.subr.bf16.mxu0 %v1210
    %1521 = vmatpush1.bf16.msra.mxu0 %v1209
    %1522 = vmatprep.subr.bf16.mxu0 %v1214
    %1523 = vmatpush1.bf16.msra.mxu0 %v1213
    %1524 = vmatprep.subr.bf16.mxu0 %v1218
    %1525 = vmatpush1.bf16.msra.mxu0 %v1217
    %1526 = vmatprep.subr.bf16.mxu0 %v1222
    %1527 = vmatpush1.bf16.msra.mxu0 %v1221
    %1528 = vmatprep.subr.bf16.mxu0 %v1226
    %1529 = vmatpush1.bf16.msra.mxu0 %v1225
    %1530 = vmatprep.subr.bf16.mxu0 %v1230
    %1531 = vmatpush1.bf16.msra.mxu0 %v1229
    %1532 = vmatprep.subr.bf16.mxu0 %v1234
    %1533 = vmatpush1.bf16.msra.mxu0 %v1233
    %1534 = vmatprep.subr.bf16.mxu0 %v1238
    %1535 = vmatpush1.bf16.msra.mxu0 %v1237
    %1536 = vmatprep.subr.bf16.mxu0 %v1242
    %1537 = vmatpush1.bf16.msra.mxu0 %v1241
    %1538 = vmatprep.subr.bf16.mxu0 %v1246
    %1539 = vmatpush1.bf16.msra.mxu0 %v1245
    %1540 = vmatprep.subr.bf16.mxu0 %v1250
    %1541 = vmatpush1.bf16.msra.mxu0 %v1249
    %1542 = vmatprep.subr.bf16.mxu0 %v1254
    %1543 = vmatpush1.bf16.msra.mxu0 %v1253
    %1544 = vmatprep.subr.bf16.mxu0 %v1258
    %1545 = vmatpush1.bf16.msra.mxu0 %v1257
    %1546 = vmatprep.subr.bf16.mxu0 %v1262
    %1547 = vmatpush1.bf16.msra.mxu0 %v1261
    %1548 = vmatprep.subr.bf16.mxu0 %v1266
    %1549 = vmatpush1.bf16.msra.mxu0 %v1265
    %1550 = vmatprep.mubr.bf16.mxu0 %v604
    %1551 = vmatmul.mubr.bf16.gmra.mrb[0].mxu0 %v603
    %v1552 = vpop.f32.mrb[0].mxu0
    %v1553 = vadd.f32 %v1512, %v1552
    %v1554 = vpop.f32.mrb[0].mxu0
    %v1555 = vadd.f32 %v1514, %v1554
    %v1556 = vpop.f32.mrb[0].mxu0
    %v1557 = vpop.f32.mrb[0].mxu0
    %1558 = vdwg.mxu0
    %1559 = vst [vmem:[#allocation7] sm:$0xff] %v1471
    %1560 = vst [vmem:[#allocation7 + $0x8] sm:$0xff] %v1473
    %1561 = vst [vmem:[#allocation7 + $0x10] sm:$0xff] %v1553
    %1562 = vst [vmem:[#allocation7 + $0x18] sm:$0xff] %v1555
    // Predicated region
    $region30: #{sinusoidal_position_embeddings.1} parent=1 // pred_check
      _
    $region31: #{sinusoidal_position_embeddings.1} parent=1 // pred_check_branch
      %1564 = sbr.rel (0) target = $region33
    $region32: #{sinusoidal_position_embeddings.1} parent=1 // pred_region
      %s1566 = ssub.s32 512, 512
      %1567 = vsyncadd [#allocation4], %s1566
      %s1569 = sshll.u32 [#allocation7], 4
      %s1570 = int_to_ptr.vmem [resolvable:$true] %s1569
      %1572 = dma.vmem_to_hbm [thread:$0]  %s1570, 512, %s5, [#allocation4]
    $region33: #{sinusoidal_position_embeddings.1} parent=1 // pred_fallthru
      _
    // Predicated region
    $region34: #{sinusoidal_position_embeddings.1} parent=1 // pred_check
      _
    $region35: #{sinusoidal_position_embeddings.1} parent=1 // pred_check_branch
      %1574 = sbr.rel (0) target = $region37
    $region36: #{sinusoidal_position_embeddings.1} parent=1 // pred_region
      %1575 = dma.done [#allocation4], 512
    $region37: #{sinusoidal_position_embeddings.1} parent=1 // pred_fallthru
      _
    %1576 = vsyncpa [#allocation3], 1
    %1577 = vsyncpa [#allocation6], 1
    %1578 = vsyncpa [#allocation4], 1

</llo_original>
